<compile_context>
chip_gen: v7x
topology: tpu7x:2x2x1
jax: 0.10.0
libtpu: 0.0.40
codegen_flags: <defaults>
</compile_context>

<pallas_src>
import numpy as np
import jax
import jax.numpy as jnp
from jax.experimental import pallas as pl
from jax.experimental.pallas import tpu as pltpu

LANE = 128
DEFAULT_TILE_N = 8192               # rows of x per grid step (multiple of 128)
# VMEM budget @ tile 8192, d<=128:  2*8192*128*4 (x, dbl-buf) +
# 3*8192*128*4 (h1..h3) + 2*8*8192*4 (out, dbl-buf) ~= 21 MiB; 48 MiB gives
# headroom on all of v5e/v6e/v7x.
VMEM_LIMIT_BYTES = 48 * 1024 * 1024


def _cdiv(a, b):
    return -(-a // b)


def _round_up(x, m):
    return ((x + m - 1) // m) * m


def _hidden_stack(x, w1, b1, w2, b2, w3, b3):
    """relu(relu(relu(x@W1+b1)@W2+b2)@W3+b3) with f32 MXU accumulation."""
    h = jnp.maximum(jnp.dot(x, w1, preferred_element_type=jnp.float32) + b1, 0.0)
    h = jnp.maximum(jnp.dot(h, w2, preferred_element_type=jnp.float32) + b2, 0.0)
    h = jnp.maximum(jnp.dot(h, w3, preferred_element_type=jnp.float32) + b3, 0.0)
    return h


def mlp_forward_kernel(x_ref, w1_ref, b1_ref, w2_ref, b2_ref,
                       w3_ref, b3_ref, w4t_ref, b4t_ref, o_ref):
    """One batch tile -> transposed logits tile (C, tile_n), lane-dense writeback."""
    h = _hidden_stack(x_ref[...], w1_ref[...], b1_ref[...], w2_ref[...],
                      b2_ref[...], w3_ref[...], b3_ref[...])
    # Last layer as W4^T @ h^T (transpose_rhs matmul): result is already
    # (C, tile_n), so the HBM store is 128-lane dense instead of a masked
    # 2-lane store padded to 128 lanes per row.
    logits_t = jnp.einsum('ck,nk->cn', w4t_ref[...], h,
                          preferred_element_type=jnp.float32) + b4t_ref[...]
    o_ref[...] = logits_t.astype(o_ref.dtype)


def mlp_predict_kernel(x_ref, w1_ref, b1_ref, w2_ref, b2_ref,
                       w3_ref, b3_ref, w4d_ref, b4d_ref, p_ref):
    """One batch tile -> (1, tile_n) int32 predictions (fused binary argmax).

    softmax is monotone, so argmax over softmax == argmax over logits.
    score = logit[1] - logit[0]; strict '>' reproduces argmax tie-breaking
    (class 0 on ties).
    """
    h = _hidden_stack(x_ref[...], w1_ref[...], b1_ref[...], w2_ref[...],
                      b2_ref[...], w3_ref[...], b3_ref[...])
    score_t = jnp.einsum('ck,nk->cn', w4d_ref[...], h,
                         preferred_element_type=jnp.float32) + b4d_ref[...]
    p_ref[...] = (score_t > 0.0).astype(jnp.int32)


def _run_pallas_mlp(x, kparams, kernel, out_rows, out_dtype, tile_n):
    """Shared wrapper: pick tile, build grid/specs, run. No batch padding."""
    n, d = x.shape

    # Tile selection:
    #  * multiple of 128 so the transposed output block's lane dim obeys the
    #    (8,128) tiling constraint (the ragged last block is fine: the
    #    constraint is on block_shape, and partial blocks are clamped),
    #  * never (much) larger than the batch,
    #  * capped at ~n/2 so a big batch always yields >= 2 grid steps and both
    #    v7x TensorCores get work ("parallel" batch axis).
    tile_n = min(tile_n, _round_up(n, LANE))
    tile_n = max(LANE, _round_up(tile_n, LANE))
    if n > LANE:
        tile_n = min(tile_n, _round_up(_cdiv(n, 2), LANE))
    grid = (_cdiv(n, tile_n),)

    # x / out tiles march along the batch axis; weights & biases are
    # constant-index whole-array blocks (stay resident in VMEM).
    x_spec = pl.BlockSpec((tile_n, d), lambda i: (i, 0))
    out_spec = pl.BlockSpec((out_rows, tile_n), lambda i: (0, i))
    param_specs = [pl.BlockSpec(p.shape, lambda i: (0, 0)) for p in kparams]

    out_itemsize = np.dtype(out_dtype).itemsize
    cost = pl.CostEstimate(
        flops=2 * n * sum(int(w.shape[0]) * int(w.shape[1])
                          for w in kparams[0::2]),
        transcendentals=0,
        bytes_accessed=int(n * d * x.dtype.itemsize
                           + n * out_rows * out_itemsize
                           + sum(int(p.size) * p.dtype.itemsize
                                 for p in kparams)),
    )

    return pl.pallas_call(
        kernel,
        out_shape=jax.ShapeDtypeStruct((out_rows, n), out_dtype),
        grid=grid,
        in_specs=[x_spec] + param_specs,
        out_specs=out_spec,
        compiler_params=pltpu.CompilerParams(
            dimension_semantics=("parallel",),        # megacore split on v7x
            vmem_limit_bytes=VMEM_LIMIT_BYTES),
        cost_estimate=cost,
    )(x, *kparams)


def net_forward_t(x, params, tile_n=DEFAULT_TILE_N):
    """(n, d) -> (C, n) transposed logits; lane-dense HBM layout (fast path)."""
    w1, b1, w2, b2, w3, b3, w4, b4 = params
    # Tiny one-off transposes of the last-layer params (done outside the kernel).
    kparams = (w1, b1, w2, b2, w3, b3, w4.T, b4.T)
    return _run_pallas_mlp(x, kparams, mlp_forward_kernel,
                           out_rows=int(w4.shape[1]), out_dtype=jnp.float32,
                           tile_n=tile_n)


def net_forward(x, params, tile_n=DEFAULT_TILE_N):
    """Equivalent of Net.forward: (n, d) -> (n, 2) logits (PyTorch layout).

    Consumers that can take (2, n) should call net_forward_t directly and skip
    this transpose, which re-materializes the lane-sparse (n, 2) HBM layout.
    """
    return net_forward_t(x, params, tile_n).T


def net_predict(x, params, tile_n=DEFAULT_TILE_N):
    """Equivalent of Net.predict: (n, d) -> (n,) int32 class indices."""
    w1, b1, w2, b2, w3, b3, w4, b4 = params
    assert w4.shape[1] == 2, "fused binary predict assumes exactly 2 output classes"
    w4d = (w4[:, 1] - w4[:, 0])[None, :]       # (1, 10)
    b4d = (b4[:, 1] - b4[:, 0])[None, :]       # (1, 1)
    kparams = (w1, b1, w2, b2, w3, b3, w4d, b4d)
    out = _run_pallas_mlp(x, kparams, mlp_predict_kernel,
                          out_rows=1, out_dtype=jnp.int32, tile_n=tile_n)
    return out[0]                              # (1, n) -> (n,)


def init_params(d, key):
    """Deterministic init mimicking PyTorch nn.Linear default U(-1/sqrt(in), 1/sqrt(in))."""
    dims = [(d, 20), (20, 20), (20, 10), (10, 2)]
    params = []
    keys = jax.random.split(key, 2 * len(dims))
    for i, (fan_in, fan_out) in enumerate(dims):
        bound = 1.0 / jnp.sqrt(jnp.float32(fan_in))
        w = jax.random.uniform(keys[2 * i], (fan_in, fan_out),
                               minval=-bound, maxval=bound, dtype=jnp.float32)
        b = jax.random.uniform(keys[2 * i + 1], (1, fan_out),
                               minval=-bound, maxval=bound, dtype=jnp.float32)
        params.extend([w, b])
    return tuple(params)


def reference_forward(x, params):
    """Plain-JAX reference for correctness checking."""
    w1, b1, w2, b2, w3, b3, w4, b4 = params
    h = jnp.maximum(x @ w1 + b1, 0.0)
    h = jnp.maximum(h @ w2 + b2, 0.0)
    h = jnp.maximum(h @ w3 + b3, 0.0)
    return h @ w4 + b4


if __name__ == "__main__":
    key = jax.random.PRNGKey(0)
    k_x, k_p, k_x2 = jax.random.split(key, 3)

    n, d = 8, 32  # small example shapes: batch=8, feature dim d=32
    x = jax.random.normal(k_x, (n, d), dtype=jnp.float32)
    params = init_params(d, k_p)

    # Forward pass (single-tile path).
    out = jax.block_until_ready(net_forward(x, params))
    ref = reference_forward(x, params)
    assert out.shape == (n, 2)
    assert jnp.allclose(out, ref, atol=1e-5, rtol=1e-5), "forward mismatch vs reference"

    # Predict (fused argmax path, lane-dense 1-D output).
    preds = jax.block_until_ready(net_predict(x, params))
    assert preds.shape == (n,)
    assert jnp.array_equal(preds, jnp.argmax(ref, axis=1)), "predict mismatch vs reference"

    # Multi-step grid + ragged batch (n not a multiple of the tile) with NO
    # wrapper-side padding: 300 rows, 128-row tiles -> 3 blocks (last is partial).
    n2 = 300
    x2 = jax.random.normal(k_x2, (n2, d), dtype=jnp.float32)
    ref2 = reference_forward(x2, params)
    out2 = jax.block_until_ready(net_forward(x2, params, tile_n=128))
    assert out2.shape == (n2, 2)
    assert jnp.allclose(out2, ref2, atol=1e-5, rtol=1e-5), "tiled forward mismatch"
    preds2 = jax.block_until_ready(net_predict(x2, params, tile_n=128))
    assert jnp.array_equal(preds2, jnp.argmax(ref2, axis=1)), "tiled predict mismatch"

    print("KERNEL_OK")
</pallas_src>

<mosaic_0001>
module attributes {stable_mosaic.version = 11 : i64} {
  func.func @mlp_forward_kernel(%arg0: i32, %arg1: memref<128x32xf32, #tpu.memory_space<vmem>>, %arg2: memref<32x20xf32, #tpu.memory_space<vmem>>, %arg3: memref<1x20xf32, #tpu.memory_space<vmem>>, %arg4: memref<20x20xf32, #tpu.memory_space<vmem>>, %arg5: memref<1x20xf32, #tpu.memory_space<vmem>>, %arg6: memref<20x10xf32, #tpu.memory_space<vmem>>, %arg7: memref<1x10xf32, #tpu.memory_space<vmem>>, %arg8: memref<2x10xf32, #tpu.memory_space<vmem>>, %arg9: memref<2x1xf32, #tpu.memory_space<vmem>>, %arg10: memref<2x128xf32, #tpu.memory_space<vmem>>) attributes {dimension_semantics = [#tpu.dimension_semantics<parallel>], iteration_bounds = array<i64: 1>, scalar_prefetch = 0 : i64, scratch_operands = 0 : i64, tpu.core_type = #tpu.core_type<tc>, window_params = [{transform_indices = @transform_0, window_bounds = array<i64: 128, 32>}, {pipeline_mode = #tpu.pipeline_mode<synchronous>, transform_indices = @transform_1, window_bounds = array<i64: 32, 20>}, {pipeline_mode = #tpu.pipeline_mode<synchronous>, transform_indices = @transform_2, window_bounds = array<i64: 1, 20>}, {pipeline_mode = #tpu.pipeline_mode<synchronous>, transform_indices = @transform_3, window_bounds = array<i64: 20, 20>}, {pipeline_mode = #tpu.pipeline_mode<synchronous>, transform_indices = @transform_4, window_bounds = array<i64: 1, 20>}, {pipeline_mode = #tpu.pipeline_mode<synchronous>, transform_indices = @transform_5, window_bounds = array<i64: 20, 10>}, {pipeline_mode = #tpu.pipeline_mode<synchronous>, transform_indices = @transform_6, window_bounds = array<i64: 1, 10>}, {pipeline_mode = #tpu.pipeline_mode<synchronous>, transform_indices = @transform_7, window_bounds = array<i64: 2, 10>}, {pipeline_mode = #tpu.pipeline_mode<synchronous>, transform_indices = @transform_8, window_bounds = array<i64: 2, 1>}, {transform_indices = @transform_9, window_bounds = array<i64: 2, 128>}]} {
    %c0 = arith.constant 0 : index
    %c0_0 = arith.constant 0 : index
    %0 = vector.load %arg1[%c0, %c0_0] : memref<128x32xf32, #tpu.memory_space<vmem>>, vector<128x32xf32>
    %c0_1 = arith.constant 0 : index
    %c0_2 = arith.constant 0 : index
    %1 = vector.load %arg2[%c0_1, %c0_2] : memref<32x20xf32, #tpu.memory_space<vmem>>, vector<32x20xf32>
    %c0_3 = arith.constant 0 : index
    %c0_4 = arith.constant 0 : index
    %2 = vector.load %arg3[%c0_3, %c0_4] : memref<1x20xf32, #tpu.memory_space<vmem>>, vector<1x20xf32>
    %c0_5 = arith.constant 0 : index
    %c0_6 = arith.constant 0 : index
    %3 = vector.load %arg4[%c0_5, %c0_6] : memref<20x20xf32, #tpu.memory_space<vmem>>, vector<20x20xf32>
    %c0_7 = arith.constant 0 : index
    %c0_8 = arith.constant 0 : index
    %4 = vector.load %arg5[%c0_7, %c0_8] : memref<1x20xf32, #tpu.memory_space<vmem>>, vector<1x20xf32>
    %c0_9 = arith.constant 0 : index
    %c0_10 = arith.constant 0 : index
    %5 = vector.load %arg6[%c0_9, %c0_10] : memref<20x10xf32, #tpu.memory_space<vmem>>, vector<20x10xf32>
    %c0_11 = arith.constant 0 : index
    %c0_12 = arith.constant 0 : index
    %6 = vector.load %arg7[%c0_11, %c0_12] : memref<1x10xf32, #tpu.memory_space<vmem>>, vector<1x10xf32>
    %cst = arith.constant dense<0.000000e+00> : vector<128x20xf32>
    %7 = tpu.matmul %0, %1, %cst {dimension_numbers = #tpu.dot_dimension_numbers<[1], [0], [0], [1], [0, 0, 1, 1], [], []>} : vector<128x32xf32>, vector<32x20xf32>, vector<128x20xf32> -> vector<128x20xf32>
    %8 = vector.broadcast %2 : vector<1x20xf32> to vector<128x20xf32>
    %9 = arith.addf %7, %8 : vector<128x20xf32>
    %cst_13 = arith.constant 0.000000e+00 : f32
    %10 = vector.broadcast %cst_13 : f32 to vector<128x20xf32>
    %11 = arith.maximumf %9, %10 : vector<128x20xf32>
    %cst_14 = arith.constant dense<0.000000e+00> : vector<128x20xf32>
    %12 = tpu.matmul %11, %3, %cst_14 {dimension_numbers = #tpu.dot_dimension_numbers<[1], [0], [0], [1], [0, 0, 1, 1], [], []>} : vector<128x20xf32>, vector<20x20xf32>, vector<128x20xf32> -> vector<128x20xf32>
    %13 = vector.broadcast %4 : vector<1x20xf32> to vector<128x20xf32>
    %14 = arith.addf %12, %13 : vector<128x20xf32>
    %cst_15 = arith.constant 0.000000e+00 : f32
    %15 = vector.broadcast %cst_15 : f32 to vector<128x20xf32>
    %16 = arith.maximumf %14, %15 : vector<128x20xf32>
    %cst_16 = arith.constant dense<0.000000e+00> : vector<128x10xf32>
    %17 = tpu.matmul %16, %5, %cst_16 {dimension_numbers = #tpu.dot_dimension_numbers<[1], [0], [0], [1], [0, 0, 1, 1], [], []>} : vector<128x20xf32>, vector<20x10xf32>, vector<128x10xf32> -> vector<128x10xf32>
    %18 = vector.broadcast %6 : vector<1x10xf32> to vector<128x10xf32>
    %19 = arith.addf %17, %18 : vector<128x10xf32>
    %cst_17 = arith.constant 0.000000e+00 : f32
    %20 = vector.broadcast %cst_17 : f32 to vector<128x10xf32>
    %21 = arith.maximumf %19, %20 : vector<128x10xf32>
    %c0_18 = arith.constant 0 : index
    %c0_19 = arith.constant 0 : index
    %22 = vector.load %arg8[%c0_18, %c0_19] : memref<2x10xf32, #tpu.memory_space<vmem>>, vector<2x10xf32>
    "tpu.trace_start"() <{level = 10 : i32, message = "ck,nk->cn"}> : () -> ()
    %cst_20 = arith.constant dense<0.000000e+00> : vector<2x128xf32>
    %23 = tpu.matmul %22, %21, %cst_20 {dimension_numbers = #tpu.dot_dimension_numbers<[1], [1], [0], [0], [0, 0, 1, 0], [], []>} : vector<2x10xf32>, vector<128x10xf32>, vector<2x128xf32> -> vector<2x128xf32>
    "tpu.trace_stop"() : () -> ()
    %c0_21 = arith.constant 0 : index
    %c0_22 = arith.constant 0 : index
    %24 = vector.load %arg9[%c0_21, %c0_22] : memref<2x1xf32, #tpu.memory_space<vmem>>, vector<2x1xf32>
    %25 = vector.broadcast %24 : vector<2x1xf32> to vector<2x128xf32>
    %26 = arith.addf %23, %25 : vector<2x128xf32>
    %c0_23 = arith.constant 0 : index
    %c0_24 = arith.constant 0 : index
    %27 = vector.load %arg10[%c0_23, %c0_24] : memref<2x128xf32, #tpu.memory_space<vmem>>, vector<2x128xf32>
    tpu.vector_store %arg10[%c0_23, %c0_24], %26 {strides = array<i32>} : memref<2x128xf32, #tpu.memory_space<vmem>>, vector<2x128xf32>,
    return
  }
  func.func @transform_0(%arg0: i32) -> (i32, i32) {
    %c0_i32 = arith.constant 0 : i32
    %c0_i32_0 = arith.constant 0 : i32
    return %arg0, %c0_i32 : i32, i32
  }
  func.func @transform_1(%arg0: i32) -> (i32, i32) {
    %c0_i32 = arith.constant 0 : i32
    %c0_i32_0 = arith.constant 0 : i32
    %c0_i32_1 = arith.constant 0 : i32
    return %c0_i32, %c0_i32_0 : i32, i32
  }
  func.func @transform_2(%arg0: i32) -> (i32, i32) {
    %c0_i32 = arith.constant 0 : i32
    %c0_i32_0 = arith.constant 0 : i32
    %c0_i32_1 = arith.constant 0 : i32
    return %c0_i32, %c0_i32_0 : i32, i32
  }
  func.func @transform_3(%arg0: i32) -> (i32, i32) {
    %c0_i32 = arith.constant 0 : i32
    %c0_i32_0 = arith.constant 0 : i32
    %c0_i32_1 = arith.constant 0 : i32
    return %c0_i32, %c0_i32_0 : i32, i32
  }
  func.func @transform_4(%arg0: i32) -> (i32, i32) {
    %c0_i32 = arith.constant 0 : i32
    %c0_i32_0 = arith.constant 0 : i32
    %c0_i32_1 = arith.constant 0 : i32
    return %c0_i32, %c0_i32_0 : i32, i32
  }
  func.func @transform_5(%arg0: i32) -> (i32, i32) {
    %c0_i32 = arith.constant 0 : i32
    %c0_i32_0 = arith.constant 0 : i32
    %c0_i32_1 = arith.constant 0 : i32
    return %c0_i32, %c0_i32_0 : i32, i32
  }
  func.func @transform_6(%arg0: i32) -> (i32, i32) {
    %c0_i32 = arith.constant 0 : i32
    %c0_i32_0 = arith.constant 0 : i32
    %c0_i32_1 = arith.constant 0 : i32
    return %c0_i32, %c0_i32_0 : i32, i32
  }
  func.func @transform_7(%arg0: i32) -> (i32, i32) {
    %c0_i32 = arith.constant 0 : i32
    %c0_i32_0 = arith.constant 0 : i32
    %c0_i32_1 = arith.constant 0 : i32
    return %c0_i32, %c0_i32_0 : i32, i32
  }
  func.func @transform_8(%arg0: i32) -> (i32, i32) {
    %c0_i32 = arith.constant 0 : i32
    %c0_i32_0 = arith.constant 0 : i32
    %c0_i32_1 = arith.constant 0 : i32
    return %c0_i32, %c0_i32_0 : i32, i32
  }
  func.func @transform_9(%arg0: i32) -> (i32, i32) {
    %c0_i32 = arith.constant 0 : i32
    %c0_i32_0 = arith.constant 0 : i32
    return %c0_i32, %arg0 : i32, i32
  }
}

</mosaic_0001>

<llo_original>
// kernel: tpu_custom_call.1
$region0: #{tpu_custom_call.1}
  #allocation0 [shape = 'u32[]', space=smem, size = 0x4, offset = 0x4, fixed_abs, tag = 'smem constant byte address 0x4 - core index']
  #allocation1 [shape = 'u32[144,128]{1,0:T(1,128)}', space=vmem, size = 0x12000, scoped, tag = 'internal scratch']
  %s0 = inlined_call_operand.vmem [shape: f32[8,32], index: 0, kind: input, shape index: {}]
  %s1 = inlined_call_operand.vmem [shape: f32[32,20], index: 1, kind: input, shape index: {}]
  %s2 = inlined_call_operand.vmem [shape: f32[1,20], index: 2, kind: input, shape index: {}]
  %s3 = inlined_call_operand.vmem [shape: f32[20,20], index: 3, kind: input, shape index: {}]
  %s4 = inlined_call_operand.vmem [shape: f32[1,20], index: 4, kind: input, shape index: {}]
  %s5 = inlined_call_operand.vmem [shape: f32[20,10], index: 5, kind: input, shape index: {}]
  %s6 = inlined_call_operand.vmem [shape: f32[1,10], index: 6, kind: input, shape index: {}]
  %s7 = inlined_call_operand.vmem [shape: f32[2,10], index: 7, kind: input, shape index: {}]
  %s8 = inlined_call_operand.vmem [shape: f32[2,1], index: 8, kind: input, shape index: {}]
  %s9 = inlined_call_operand.hbm [shape: f32[2,8], index: 9, kind: output, shape index: {}]
  %s10 = sld [smem:[#allocation0]]
  $region46: #{tpu_custom_call.1} parent=0
    _
  %s12 = ssub.s32 1, %s10
  %s13 = scalar_select 0, %s12, %s10
  $region1: #{tpu_custom_call.1} parent=0
    #allocation2 [shape = 'u8[1024]{0}', space=vmem, size = 0x400, scoped, tag = 'output window, operand 0, single buffered']
    #allocation3 [shape = 's32[1]{0}', space=sflag, size = 0x4, scoped, tag = 'scoped memory for tpu_custom_call.1']
    %14 = vsyncpa [#allocation3], 0
    // Predicated region
    $region2: #{tpu_custom_call.1} parent=1 // pred_check
      _
    $region3: #{tpu_custom_call.1} parent=1 // pred_check_branch
      %16 = sbr.rel (0) target = $region5
    $region4: #{tpu_custom_call.1} parent=1 // pred_region
      _
    $region5: #{tpu_custom_call.1} parent=1 // pred_fallthru
      _
    // Predicated region
    $region6: #{tpu_custom_call.1} parent=1 // pred_check
      _
    $region7: #{tpu_custom_call.1} parent=1 // pred_check_branch
      %18 = sbr.rel (0) target = $region9
    $region8: #{tpu_custom_call.1} parent=1 // pred_region
      _
    $region9: #{tpu_custom_call.1} parent=1 // pred_fallthru
      _
    // Predicated region
    $region10: #{tpu_custom_call.1} parent=1 // pred_check
      _
    $region11: #{tpu_custom_call.1} parent=1 // pred_check_branch
      %20 = sbr.rel (0) target = $region13
    $region12: #{tpu_custom_call.1} parent=1 // pred_region
      _
    $region13: #{tpu_custom_call.1} parent=1 // pred_fallthru
      _
    // Predicated region
    $region14: #{tpu_custom_call.1} parent=1 // pred_check
      _
    $region15: #{tpu_custom_call.1} parent=1 // pred_check_branch
      %22 = sbr.rel (0) target = $region17
    $region16: #{tpu_custom_call.1} parent=1 // pred_region
      _
    $region17: #{tpu_custom_call.1} parent=1 // pred_fallthru
      _
    // Predicated region
    $region18: #{tpu_custom_call.1} parent=1 // pred_check
      _
    $region19: #{tpu_custom_call.1} parent=1 // pred_check_branch
      %24 = sbr.rel (0) target = $region21
    $region20: #{tpu_custom_call.1} parent=1 // pred_region
      _
    $region21: #{tpu_custom_call.1} parent=1 // pred_fallthru
      _
    // Predicated region
    $region22: #{tpu_custom_call.1} parent=1 // pred_check
      _
    $region23: #{tpu_custom_call.1} parent=1 // pred_check_branch
      %26 = sbr.rel (0) target = $region25
    $region24: #{tpu_custom_call.1} parent=1 // pred_region
      _
    $region25: #{tpu_custom_call.1} parent=1 // pred_fallthru
      _
    // Predicated region
    $region26: #{tpu_custom_call.1} parent=1 // pred_check
      _
    $region27: #{tpu_custom_call.1} parent=1 // pred_check_branch
      %28 = sbr.rel (0) target = $region29
    $region28: #{tpu_custom_call.1} parent=1 // pred_region
      _
    $region29: #{tpu_custom_call.1} parent=1 // pred_fallthru
      _
    // Predicated region
    $region30: #{tpu_custom_call.1} parent=1 // pred_check
      _
    $region31: #{tpu_custom_call.1} parent=1 // pred_check_branch
      %30 = sbr.rel (0) target = $region33
    $region32: #{tpu_custom_call.1} parent=1 // pred_region
      _
    $region33: #{tpu_custom_call.1} parent=1 // pred_fallthru
      _
    // Predicated region
    $region34: #{tpu_custom_call.1} parent=1 // pred_check
      _
    $region35: #{tpu_custom_call.1} parent=1 // pred_check_branch
      %32 = sbr.rel (0) target = $region37
    $region36: #{tpu_custom_call.1} parent=1 // pred_region
      _
    $region37: #{tpu_custom_call.1} parent=1 // pred_fallthru
      _
    %v33 = vld [vmem:[%s0] sm:$0xff]
    %v34 = vld [vmem:[%s0 + $0x8] sm:$0xff]
    %v35 = vld [vmem:[%s0 + $0x10] sm:$0xff]
    %v36 = vld [vmem:[%s0 + $0x18] sm:$0xff]
    %v37 = vld [vmem:[%s0 + $0x20] sm:$0xff]
    %v38 = vld [vmem:[%s0 + $0x28] sm:$0xff]
    %v39 = vld [vmem:[%s0 + $0x30] sm:$0xff]
    %v40 = vld [vmem:[%s0 + $0x38] sm:$0xff]
    %v41 = vld [vmem:[%s0 + $0x40] sm:$0xff]
    %v42 = vld [vmem:[%s0 + $0x48] sm:$0xff]
    %v43 = vld [vmem:[%s0 + $0x50] sm:$0xff]
    %v44 = vld [vmem:[%s0 + $0x58] sm:$0xff]
    %v45 = vld [vmem:[%s0 + $0x60] sm:$0xff]
    %v46 = vld [vmem:[%s0 + $0x68] sm:$0xff]
    %v47 = vld [vmem:[%s0 + $0x70] sm:$0xff]
    %v48 = vld [vmem:[%s0 + $0x78] sm:$0xff]
    %v49 = vld [vmem:[%s1] sm:$0xff]
    %v50 = vld [vmem:[%s1 + $0x8] sm:$0xff]
    %v51 = vld [vmem:[%s1 + $0x10] sm:$0xff]
    %v52 = vld [vmem:[%s1 + $0x18] sm:$0xff]
    %v53 = vld [vmem:[%s2] sm:$0x1]
    %v54 = vld [vmem:[%s3] sm:$0xff]
    %v55 = vld [vmem:[%s3 + $0x8] sm:$0xff]
    %v56 = vld [vmem:[%s3 + $0x10] sm:$0xf]
    %v57 = vld [vmem:[%s4] sm:$0x1]
    %v58 = vld [vmem:[%s5] sm:$0xff]
    %v59 = vld [vmem:[%s5 + $0x8] sm:$0xff]
    %v60 = vld [vmem:[%s5 + $0x10] sm:$0xf]
    %v61 = vld [vmem:[%s6] sm:$0x1]
    %v63 = vlaneseq
    %v64 = vshrl.u32 %v63, 7
    %v65 = vsub.s32 0, %v64
    %v66 = vrot.slane %v53, %v65
    %vm68 = vcmask 261120
    %v70 = vsel %vm68, %v33, 0
    %v73 = vsel %vm68, %v34, 0
    %v76 = vsel %vm68, %v35, 0
    %v79 = vsel %vm68, %v36, 0
    %v82 = vsel %vm68, %v37, 0
    %v85 = vsel %vm68, %v38, 0
    %v88 = vsel %vm68, %v39, 0
    %v91 = vsel %vm68, %v40, 0
    %v94 = vsel %vm68, %v41, 0
    %v97 = vsel %vm68, %v42, 0
    %v100 = vsel %vm68, %v43, 0
    %v103 = vsel %vm68, %v44, 0
    %v106 = vsel %vm68, %v45, 0
    %v109 = vsel %vm68, %v46, 0
    %v112 = vsel %vm68, %v47, 0
    %v115 = vsel %vm68, %v48, 0
    %117 = vmatprep.subr.mxu0 0.0
    %118 = vmatpush1.msra.mxu0 %v49
    %119 = vmatprep.subr.mxu0 0.0
    %120 = vmatpush1.msra.mxu0 %v50
    %121 = vmatprep.subr.mxu0 0.0
    %122 = vmatpush1.msra.mxu0 %v51
    %123 = vmatprep.subr.mxu0 0.0
    %124 = vmatpush1.msra.mxu0 %v52
    %125 = vmatprep.subr.mxu0 0.0
    %126 = vmatpush1.msra.mxu0 0.0
    %127 = vmatprep.subr.mxu0 0.0
    %128 = vmatpush1.msra.mxu0 0.0
    %129 = vmatprep.subr.mxu0 0.0
    %130 = vmatpush1.msra.mxu0 0.0
    %131 = vmatprep.subr.mxu0 0.0
    %132 = vmatpush1.msra.mxu0 0.0
    %133 = vmatprep.subr.mxu0 0.0
    %134 = vmatpush1.msra.mxu0 0.0
    %135 = vmatprep.subr.mxu0 0.0
    %136 = vmatpush1.msra.mxu0 0.0
    %137 = vmatprep.subr.mxu0 0.0
    %138 = vmatpush1.msra.mxu0 0.0
    %139 = vmatprep.subr.mxu0 0.0
    %140 = vmatpush1.msra.mxu0 0.0
    %141 = vmatprep.subr.mxu0 0.0
    %142 = vmatpush1.msra.mxu0 0.0
    %143 = vmatprep.subr.mxu0 0.0
    %144 = vmatpush1.msra.mxu0 0.0
    %145 = vmatprep.subr.mxu0 0.0
    %146 = vmatpush1.msra.mxu0 0.0
    %147 = vmatprep.subr.mxu0 0.0
    %148 = vmatpush1.msra.mxu0 0.0
    %149 = vmatprep.subr.mxu0 0.0
    %150 = vmatpush1.msra.mxu0 0.0
    %151 = vmatprep.subr.mxu0 0.0
    %152 = vmatpush1.msra.mxu0 0.0
    %153 = vmatprep.subr.mxu0 0.0
    %154 = vmatpush1.msra.mxu0 0.0
    %155 = vmatprep.subr.mxu0 0.0
    %156 = vmatpush1.msra.mxu0 0.0
    %157 = vmatprep.subr.mxu0 0.0
    %158 = vmatpush1.msra.mxu0 0.0
    %159 = vmatprep.subr.mxu0 0.0
    %160 = vmatpush1.msra.mxu0 0.0
    %161 = vmatprep.subr.mxu0 0.0
    %162 = vmatpush1.msra.mxu0 0.0
    %163 = vmatprep.subr.mxu0 0.0
    %164 = vmatpush1.msra.mxu0 0.0
    %165 = vmatprep.subr.mxu0 0.0
    %166 = vmatpush1.msra.mxu0 0.0
    %167 = vmatprep.subr.mxu0 0.0
    %168 = vmatpush1.msra.mxu0 0.0
    %169 = vmatprep.subr.mxu0 0.0
    %170 = vmatpush1.msra.mxu0 0.0
    %171 = vmatprep.subr.mxu0 0.0
    %172 = vmatpush1.msra.mxu0 0.0
    %173 = vmatprep.subr.mxu0 0.0
    %174 = vmatpush1.msra.mxu0 0.0
    %175 = vmatprep.subr.mxu0 0.0
    %176 = vmatpush1.msra.mxu0 0.0
    %177 = vmatprep.subr.mxu0 0.0
    %178 = vmatpush1.msra.mxu0 0.0
    %179 = vmatprep.subr.mxu0 0.0
    %180 = vmatpush1.msra.mxu0 0.0
    %181 = vmatprep.mubr.f32.mxu0 0.0
    %182 = vmatmul.mubr.f32.gmra.mrb[0].mxu0 %v70
    %v183 = vpop.f32.mrb[0].mxu0
    %v184 = vadd.f32 %v66, %v183
    %v185 = vpop.f32.mrb[0].mxu0
    %186 = vmatprep.mubr.f32.mxu0 0.0
    %187 = vmatmul.mubr.f32.gmra.mrb[0].mxu0 %v73
    %v188 = vpop.f32.mrb[0].mxu0
    %v189 = vadd.f32 %v66, %v188
    %v190 = vpop.f32.mrb[0].mxu0
    %191 = vmatprep.mubr.f32.mxu0 0.0
    %192 = vmatmul.mubr.f32.gmra.mrb[0].mxu0 %v76
    %v193 = vpop.f32.mrb[0].mxu0
    %v194 = vadd.f32 %v66, %v193
    %v195 = vpop.f32.mrb[0].mxu0
    %196 = vmatprep.mubr.f32.mxu0 0.0
    %197 = vmatmul.mubr.f32.gmra.mrb[0].mxu0 %v79
    %v198 = vpop.f32.mrb[0].mxu0
    %v199 = vadd.f32 %v66, %v198
    %v200 = vpop.f32.mrb[0].mxu0
    %201 = vmatprep.mubr.f32.mxu0 0.0
    %202 = vmatmul.mubr.f32.gmra.mrb[0].mxu0 %v82
    %v203 = vpop.f32.mrb[0].mxu0
    %v204 = vadd.f32 %v66, %v203
    %v205 = vpop.f32.mrb[0].mxu0
    %206 = vmatprep.mubr.f32.mxu0 0.0
    %207 = vmatmul.mubr.f32.gmra.mrb[0].mxu0 %v85
    %v208 = vpop.f32.mrb[0].mxu0
    %v209 = vadd.f32 %v66, %v208
    %v210 = vpop.f32.mrb[0].mxu0
    %211 = vmatprep.mubr.f32.mxu0 0.0
    %212 = vmatmul.mubr.f32.gmra.mrb[0].mxu0 %v88
    %v213 = vpop.f32.mrb[0].mxu0
    %v214 = vadd.f32 %v66, %v213
    %v215 = vpop.f32.mrb[0].mxu0
    %216 = vmatprep.mubr.f32.mxu0 0.0
    %217 = vmatmul.mubr.f32.gmra.mrb[0].mxu0 %v91
    %v218 = vpop.f32.mrb[0].mxu0
    %v219 = vadd.f32 %v66, %v218
    %v220 = vpop.f32.mrb[0].mxu0
    %221 = vmatprep.mubr.f32.mxu0 0.0
    %222 = vmatmul.mubr.f32.gmra.mrb[0].mxu0 %v94
    %v223 = vpop.f32.mrb[0].mxu0
    %v224 = vadd.f32 %v66, %v223
    %v225 = vpop.f32.mrb[0].mxu0
    %226 = vmatprep.mubr.f32.mxu0 0.0
    %227 = vmatmul.mubr.f32.gmra.mrb[0].mxu0 %v97
    %v228 = vpop.f32.mrb[0].mxu0
    %v229 = vadd.f32 %v66, %v228
    %v230 = vpop.f32.mrb[0].mxu0
    %231 = vmatprep.mubr.f32.mxu0 0.0
    %232 = vmatmul.mubr.f32.gmra.mrb[0].mxu0 %v100
    %v233 = vpop.f32.mrb[0].mxu0
    %v234 = vadd.f32 %v66, %v233
    %v235 = vpop.f32.mrb[0].mxu0
    %236 = vmatprep.mubr.f32.mxu0 0.0
    %237 = vmatmul.mubr.f32.gmra.mrb[0].mxu0 %v103
    %v238 = vpop.f32.mrb[0].mxu0
    %v239 = vadd.f32 %v66, %v238
    %v240 = vpop.f32.mrb[0].mxu0
    %241 = vmatprep.mubr.f32.mxu0 0.0
    %242 = vmatmul.mubr.f32.gmra.mrb[0].mxu0 %v106
    %v243 = vpop.f32.mrb[0].mxu0
    %v244 = vadd.f32 %v66, %v243
    %v245 = vpop.f32.mrb[0].mxu0
    %246 = vmatprep.mubr.f32.mxu0 0.0
    %247 = vmatmul.mubr.f32.gmra.mrb[0].mxu0 %v109
    %v248 = vpop.f32.mrb[0].mxu0
    %v249 = vadd.f32 %v66, %v248
    %v250 = vpop.f32.mrb[0].mxu0
    %251 = vmatprep.mubr.f32.mxu0 0.0
    %252 = vmatmul.mubr.f32.gmra.mrb[0].mxu0 %v112
    %v253 = vpop.f32.mrb[0].mxu0
    %v254 = vadd.f32 %v66, %v253
    %v255 = vpop.f32.mrb[0].mxu0
    %256 = vmatprep.mubr.f32.mxu0 0.0
    %257 = vmatmul.mubr.f32.gmra.mrb[0].mxu0 %v115
    %v258 = vpop.f32.mrb[0].mxu0
    %v259 = vadd.f32 %v66, %v258
    %v260 = vpop.f32.mrb[0].mxu0
    %261 = vdwg.mxu0
    %v262 = vmax.f32 %v184, 0.0
    %v263 = vmax.f32 %v189, 0.0
    %v264 = vmax.f32 %v194, 0.0
    %v265 = vmax.f32 %v199, 0.0
    %v266 = vmax.f32 %v204, 0.0
    %v267 = vmax.f32 %v209, 0.0
    %v268 = vmax.f32 %v214, 0.0
    %v269 = vmax.f32 %v219, 0.0
    %v270 = vmax.f32 %v224, 0.0
    %v271 = vmax.f32 %v229, 0.0
    %v272 = vmax.f32 %v234, 0.0
    %v273 = vmax.f32 %v239, 0.0
    %v274 = vmax.f32 %v244, 0.0
    %v275 = vmax.f32 %v249, 0.0
    %v276 = vmax.f32 %v254, 0.0
    %v277 = vmax.f32 %v259, 0.0
    %v279 = vlaneseq
    %v280 = vshrl.u32 %v279, 7
    %v281 = vsub.s32 0, %v280
    %v282 = vrot.slane %v57, %v281
    %vm284 = vcmask 162816
    %v286 = vsel %vm284, %v262, 0
    %v289 = vsel %vm284, %v263, 0
    %v292 = vsel %vm284, %v264, 0
    %v295 = vsel %vm284, %v265, 0
    %v298 = vsel %vm284, %v266, 0
    %v301 = vsel %vm284, %v267, 0
    %v304 = vsel %vm284, %v268, 0
    %v307 = vsel %vm284, %v269, 0
    %v310 = vsel %vm284, %v270, 0
    %v313 = vsel %vm284, %v271, 0
    %v316 = vsel %vm284, %v272, 0
    %v319 = vsel %vm284, %v273, 0
    %v322 = vsel %vm284, %v274, 0
    %v325 = vsel %vm284, %v275, 0
    %v328 = vsel %vm284, %v276, 0
    %v331 = vsel %vm284, %v277, 0
    %vm333 = vcmask 1043456
    %v335 = vsel %vm333, %v56, 0
    %337 = vmatprep.subr.mxu0 0.0
    %338 = vmatpush1.msra.mxu0 %v54
    %339 = vmatprep.subr.mxu0 0.0
    %340 = vmatpush1.msra.mxu0 %v55
    %341 = vmatprep.subr.mxu0 0.0
    %342 = vmatpush1.msra.mxu0 %v335
    %343 = vmatprep.subr.mxu0 0.0
    %344 = vmatpush1.msra.mxu0 0.0
    %345 = vmatprep.subr.mxu0 0.0
    %346 = vmatpush1.msra.mxu0 0.0
    %347 = vmatprep.subr.mxu0 0.0
    %348 = vmatpush1.msra.mxu0 0.0
    %349 = vmatprep.subr.mxu0 0.0
    %350 = vmatpush1.msra.mxu0 0.0
    %351 = vmatprep.subr.mxu0 0.0
    %352 = vmatpush1.msra.mxu0 0.0
    %353 = vmatprep.subr.mxu0 0.0
    %354 = vmatpush1.msra.mxu0 0.0
    %355 = vmatprep.subr.mxu0 0.0
    %356 = vmatpush1.msra.mxu0 0.0
    %357 = vmatprep.subr.mxu0 0.0
    %358 = vmatpush1.msra.mxu0 0.0
    %359 = vmatprep.subr.mxu0 0.0
    %360 = vmatpush1.msra.mxu0 0.0
    %361 = vmatprep.subr.mxu0 0.0
    %362 = vmatpush1.msra.mxu0 0.0
    %363 = vmatprep.subr.mxu0 0.0
    %364 = vmatpush1.msra.mxu0 0.0
    %365 = vmatprep.subr.mxu0 0.0
    %366 = vmatpush1.msra.mxu0 0.0
    %367 = vmatprep.subr.mxu0 0.0
    %368 = vmatpush1.msra.mxu0 0.0
    %369 = vmatprep.subr.mxu0 0.0
    %370 = vmatpush1.msra.mxu0 0.0
    %371 = vmatprep.subr.mxu0 0.0
    %372 = vmatpush1.msra.mxu0 0.0
    %373 = vmatprep.subr.mxu0 0.0
    %374 = vmatpush1.msra.mxu0 0.0
    %375 = vmatprep.subr.mxu0 0.0
    %376 = vmatpush1.msra.mxu0 0.0
    %377 = vmatprep.subr.mxu0 0.0
    %378 = vmatpush1.msra.mxu0 0.0
    %379 = vmatprep.subr.mxu0 0.0
    %380 = vmatpush1.msra.mxu0 0.0
    %381 = vmatprep.subr.mxu0 0.0
    %382 = vmatpush1.msra.mxu0 0.0
    %383 = vmatprep.subr.mxu0 0.0
    %384 = vmatpush1.msra.mxu0 0.0
    %385 = vmatprep.subr.mxu0 0.0
    %386 = vmatpush1.msra.mxu0 0.0
    %387 = vmatprep.subr.mxu0 0.0
    %388 = vmatpush1.msra.mxu0 0.0
    %389 = vmatprep.subr.mxu0 0.0
    %390 = vmatpush1.msra.mxu0 0.0
    %391 = vmatprep.subr.mxu0 0.0
    %392 = vmatpush1.msra.mxu0 0.0
    %393 = vmatprep.subr.mxu0 0.0
    %394 = vmatpush1.msra.mxu0 0.0
    %395 = vmatprep.subr.mxu0 0.0
    %396 = vmatpush1.msra.mxu0 0.0
    %397 = vmatprep.subr.mxu0 0.0
    %398 = vmatpush1.msra.mxu0 0.0
    %399 = vmatprep.subr.mxu0 0.0
    %400 = vmatpush1.msra.mxu0 0.0
    %401 = vmatprep.mubr.f32.mxu0 0.0
    %402 = vmatmul.mubr.f32.gmra.mrb[0].mxu0 %v286
    %v403 = vpop.f32.mrb[0].mxu0
    %v404 = vadd.f32 %v282, %v403
    %v405 = vpop.f32.mrb[0].mxu0
    %406 = vmatprep.mubr.f32.mxu0 0.0
    %407 = vmatmul.mubr.f32.gmra.mrb[0].mxu0 %v289
    %v408 = vpop.f32.mrb[0].mxu0
    %v409 = vadd.f32 %v282, %v408
    %v410 = vpop.f32.mrb[0].mxu0
    %411 = vmatprep.mubr.f32.mxu0 0.0
    %412 = vmatmul.mubr.f32.gmra.mrb[0].mxu0 %v292
    %v413 = vpop.f32.mrb[0].mxu0
    %v414 = vadd.f32 %v282, %v413
    %v415 = vpop.f32.mrb[0].mxu0
    %416 = vmatprep.mubr.f32.mxu0 0.0
    %417 = vmatmul.mubr.f32.gmra.mrb[0].mxu0 %v295
    %v418 = vpop.f32.mrb[0].mxu0
    %v419 = vadd.f32 %v282, %v418
    %v420 = vpop.f32.mrb[0].mxu0
    %421 = vmatprep.mubr.f32.mxu0 0.0
    %422 = vmatmul.mubr.f32.gmra.mrb[0].mxu0 %v298
    %v423 = vpop.f32.mrb[0].mxu0
    %v424 = vadd.f32 %v282, %v423
    %v425 = vpop.f32.mrb[0].mxu0
    %426 = vmatprep.mubr.f32.mxu0 0.0
    %427 = vmatmul.mubr.f32.gmra.mrb[0].mxu0 %v301
    %v428 = vpop.f32.mrb[0].mxu0
    %v429 = vadd.f32 %v282, %v428
    %v430 = vpop.f32.mrb[0].mxu0
    %431 = vmatprep.mubr.f32.mxu0 0.0
    %432 = vmatmul.mubr.f32.gmra.mrb[0].mxu0 %v304
    %v433 = vpop.f32.mrb[0].mxu0
    %v434 = vadd.f32 %v282, %v433
    %v435 = vpop.f32.mrb[0].mxu0
    %436 = vmatprep.mubr.f32.mxu0 0.0
    %437 = vmatmul.mubr.f32.gmra.mrb[0].mxu0 %v307
    %v438 = vpop.f32.mrb[0].mxu0
    %v439 = vadd.f32 %v282, %v438
    %v440 = vpop.f32.mrb[0].mxu0
    %441 = vmatprep.mubr.f32.mxu0 0.0
    %442 = vmatmul.mubr.f32.gmra.mrb[0].mxu0 %v310
    %v443 = vpop.f32.mrb[0].mxu0
    %v444 = vadd.f32 %v282, %v443
    %v445 = vpop.f32.mrb[0].mxu0
    %446 = vmatprep.mubr.f32.mxu0 0.0
    %447 = vmatmul.mubr.f32.gmra.mrb[0].mxu0 %v313
    %v448 = vpop.f32.mrb[0].mxu0
    %v449 = vadd.f32 %v282, %v448
    %v450 = vpop.f32.mrb[0].mxu0
    %451 = vmatprep.mubr.f32.mxu0 0.0
    %452 = vmatmul.mubr.f32.gmra.mrb[0].mxu0 %v316
    %v453 = vpop.f32.mrb[0].mxu0
    %v454 = vadd.f32 %v282, %v453
    %v455 = vpop.f32.mrb[0].mxu0
    %456 = vmatprep.mubr.f32.mxu0 0.0
    %457 = vmatmul.mubr.f32.gmra.mrb[0].mxu0 %v319
    %v458 = vpop.f32.mrb[0].mxu0
    %v459 = vadd.f32 %v282, %v458
    %v460 = vpop.f32.mrb[0].mxu0
    %461 = vmatprep.mubr.f32.mxu0 0.0
    %462 = vmatmul.mubr.f32.gmra.mrb[0].mxu0 %v322
    %v463 = vpop.f32.mrb[0].mxu0
    %v464 = vadd.f32 %v282, %v463
    %v465 = vpop.f32.mrb[0].mxu0
    %466 = vmatprep.mubr.f32.mxu0 0.0
    %467 = vmatmul.mubr.f32.gmra.mrb[0].mxu0 %v325
    %v468 = vpop.f32.mrb[0].mxu0
    %v469 = vadd.f32 %v282, %v468
    %v470 = vpop.f32.mrb[0].mxu0
    %471 = vmatprep.mubr.f32.mxu0 0.0
    %472 = vmatmul.mubr.f32.gmra.mrb[0].mxu0 %v328
    %v473 = vpop.f32.mrb[0].mxu0
    %v474 = vadd.f32 %v282, %v473
    %v475 = vpop.f32.mrb[0].mxu0
    %476 = vmatprep.mubr.f32.mxu0 0.0
    %477 = vmatmul.mubr.f32.gmra.mrb[0].mxu0 %v331
    %v478 = vpop.f32.mrb[0].mxu0
    %v479 = vadd.f32 %v282, %v478
    %v480 = vpop.f32.mrb[0].mxu0
    %481 = vdwg.mxu0
    %v482 = vmax.f32 %v404, 0.0
    %v483 = vmax.f32 %v409, 0.0
    %v484 = vmax.f32 %v414, 0.0
    %v485 = vmax.f32 %v419, 0.0
    %v486 = vmax.f32 %v424, 0.0
    %v487 = vmax.f32 %v429, 0.0
    %v488 = vmax.f32 %v434, 0.0
    %v489 = vmax.f32 %v439, 0.0
    %v490 = vmax.f32 %v444, 0.0
    %v491 = vmax.f32 %v449, 0.0
    %v492 = vmax.f32 %v454, 0.0
    %v493 = vmax.f32 %v459, 0.0
    %v494 = vmax.f32 %v464, 0.0
    %v495 = vmax.f32 %v469, 0.0
    %v496 = vmax.f32 %v474, 0.0
    %v497 = vmax.f32 %v479, 0.0
    %v499 = vlaneseq
    %v500 = vshrl.u32 %v499, 7
    %v501 = vsub.s32 0, %v500
    %v502 = vrot.slane %v61, %v501
    %v505 = vsel %vm284, %v482, 0
    %v508 = vsel %vm284, %v483, 0
    %v511 = vsel %vm284, %v484, 0
    %v514 = vsel %vm284, %v485, 0
    %v517 = vsel %vm284, %v486, 0
    %v520 = vsel %vm284, %v487, 0
    %v523 = vsel %vm284, %v488, 0
    %v526 = vsel %vm284, %v489, 0
    %v529 = vsel %vm284, %v490, 0
    %v532 = vsel %vm284, %v491, 0
    %v535 = vsel %vm284, %v492, 0
    %v538 = vsel %vm284, %v493, 0
    %v541 = vsel %vm284, %v494, 0
    %v544 = vsel %vm284, %v495, 0
    %v547 = vsel %vm284, %v496, 0
    %v550 = vsel %vm284, %v497, 0
    %v553 = vsel %vm333, %v60, 0
    %555 = vmatprep.subr.mxu0 0.0
    %556 = vmatpush1.msra.mxu0 %v58
    %557 = vmatprep.subr.mxu0 0.0
    %558 = vmatpush1.msra.mxu0 %v59
    %559 = vmatprep.subr.mxu0 0.0
    %560 = vmatpush1.msra.mxu0 %v553
    %561 = vmatprep.subr.mxu0 0.0
    %562 = vmatpush1.msra.mxu0 0.0
    %563 = vmatprep.subr.mxu0 0.0
    %564 = vmatpush1.msra.mxu0 0.0
    %565 = vmatprep.subr.mxu0 0.0
    %566 = vmatpush1.msra.mxu0 0.0
    %567 = vmatprep.subr.mxu0 0.0
    %568 = vmatpush1.msra.mxu0 0.0
    %569 = vmatprep.subr.mxu0 0.0
    %570 = vmatpush1.msra.mxu0 0.0
    %571 = vmatprep.subr.mxu0 0.0
    %572 = vmatpush1.msra.mxu0 0.0
    %573 = vmatprep.subr.mxu0 0.0
    %574 = vmatpush1.msra.mxu0 0.0
    %575 = vmatprep.subr.mxu0 0.0
    %576 = vmatpush1.msra.mxu0 0.0
    %577 = vmatprep.subr.mxu0 0.0
    %578 = vmatpush1.msra.mxu0 0.0
    %579 = vmatprep.subr.mxu0 0.0
    %580 = vmatpush1.msra.mxu0 0.0
    %581 = vmatprep.subr.mxu0 0.0
    %582 = vmatpush1.msra.mxu0 0.0
    %583 = vmatprep.subr.mxu0 0.0
    %584 = vmatpush1.msra.mxu0 0.0
    %585 = vmatprep.subr.mxu0 0.0
    %586 = vmatpush1.msra.mxu0 0.0
    %587 = vmatprep.subr.mxu0 0.0
    %588 = vmatpush1.msra.mxu0 0.0
    %589 = vmatprep.subr.mxu0 0.0
    %590 = vmatpush1.msra.mxu0 0.0
    %591 = vmatprep.subr.mxu0 0.0
    %592 = vmatpush1.msra.mxu0 0.0
    %593 = vmatprep.subr.mxu0 0.0
    %594 = vmatpush1.msra.mxu0 0.0
    %595 = vmatprep.subr.mxu0 0.0
    %596 = vmatpush1.msra.mxu0 0.0
    %597 = vmatprep.subr.mxu0 0.0
    %598 = vmatpush1.msra.mxu0 0.0
    %599 = vmatprep.subr.mxu0 0.0
    %600 = vmatpush1.msra.mxu0 0.0
    %601 = vmatprep.subr.mxu0 0.0
    %602 = vmatpush1.msra.mxu0 0.0
    %603 = vmatprep.subr.mxu0 0.0
    %604 = vmatpush1.msra.mxu0 0.0
    %605 = vmatprep.subr.mxu0 0.0
    %606 = vmatpush1.msra.mxu0 0.0
    %607 = vmatprep.subr.mxu0 0.0
    %608 = vmatpush1.msra.mxu0 0.0
    %609 = vmatprep.subr.mxu0 0.0
    %610 = vmatpush1.msra.mxu0 0.0
    %611 = vmatprep.subr.mxu0 0.0
    %612 = vmatpush1.msra.mxu0 0.0
    %613 = vmatprep.subr.mxu0 0.0
    %614 = vmatpush1.msra.mxu0 0.0
    %615 = vmatprep.subr.mxu0 0.0
    %616 = vmatpush1.msra.mxu0 0.0
    %617 = vmatprep.subr.mxu0 0.0
    %618 = vmatpush1.msra.mxu0 0.0
    %619 = vmatprep.mubr.f32.mxu0 0.0
    %620 = vmatmul.mubr.f32.gmra.mrb[0].mxu0 %v505
    %v621 = vpop.f32.mrb[0].mxu0
    %v622 = vadd.f32 %v502, %v621
    %v623 = vpop.f32.mrb[0].mxu0
    %624 = vmatprep.mubr.f32.mxu0 0.0
    %625 = vmatmul.mubr.f32.gmra.mrb[0].mxu0 %v508
    %v626 = vpop.f32.mrb[0].mxu0
    %v627 = vadd.f32 %v502, %v626
    %v628 = vpop.f32.mrb[0].mxu0
    %629 = vmatprep.mubr.f32.mxu0 0.0
    %630 = vmatmul.mubr.f32.gmra.mrb[0].mxu0 %v511
    %v631 = vpop.f32.mrb[0].mxu0
    %v632 = vadd.f32 %v502, %v631
    %v633 = vpop.f32.mrb[0].mxu0
    %634 = vmatprep.mubr.f32.mxu0 0.0
    %635 = vmatmul.mubr.f32.gmra.mrb[0].mxu0 %v514
    %v636 = vpop.f32.mrb[0].mxu0
    %v637 = vadd.f32 %v502, %v636
    %v638 = vpop.f32.mrb[0].mxu0
    %639 = vmatprep.mubr.f32.mxu0 0.0
    %640 = vmatmul.mubr.f32.gmra.mrb[0].mxu0 %v517
    %v641 = vpop.f32.mrb[0].mxu0
    %v642 = vadd.f32 %v502, %v641
    %v643 = vpop.f32.mrb[0].mxu0
    %644 = vmatprep.mubr.f32.mxu0 0.0
    %645 = vmatmul.mubr.f32.gmra.mrb[0].mxu0 %v520
    %v646 = vpop.f32.mrb[0].mxu0
    %v647 = vadd.f32 %v502, %v646
    %v648 = vpop.f32.mrb[0].mxu0
    %649 = vmatprep.mubr.f32.mxu0 0.0
    %650 = vmatmul.mubr.f32.gmra.mrb[0].mxu0 %v523
    %v651 = vpop.f32.mrb[0].mxu0
    %v652 = vadd.f32 %v502, %v651
    %v653 = vpop.f32.mrb[0].mxu0
    %654 = vmatprep.mubr.f32.mxu0 0.0
    %655 = vmatmul.mubr.f32.gmra.mrb[0].mxu0 %v526
    %v656 = vpop.f32.mrb[0].mxu0
    %v657 = vadd.f32 %v502, %v656
    %v658 = vpop.f32.mrb[0].mxu0
    %659 = vmatprep.mubr.f32.mxu0 0.0
    %660 = vmatmul.mubr.f32.gmra.mrb[0].mxu0 %v529
    %v661 = vpop.f32.mrb[0].mxu0
    %v662 = vadd.f32 %v502, %v661
    %v663 = vpop.f32.mrb[0].mxu0
    %664 = vmatprep.mubr.f32.mxu0 0.0
    %665 = vmatmul.mubr.f32.gmra.mrb[0].mxu0 %v532
    %v666 = vpop.f32.mrb[0].mxu0
    %v667 = vadd.f32 %v502, %v666
    %v668 = vpop.f32.mrb[0].mxu0
    %669 = vmatprep.mubr.f32.mxu0 0.0
    %670 = vmatmul.mubr.f32.gmra.mrb[0].mxu0 %v535
    %v671 = vpop.f32.mrb[0].mxu0
    %v672 = vadd.f32 %v502, %v671
    %v673 = vpop.f32.mrb[0].mxu0
    %674 = vmatprep.mubr.f32.mxu0 0.0
    %675 = vmatmul.mubr.f32.gmra.mrb[0].mxu0 %v538
    %v676 = vpop.f32.mrb[0].mxu0
    %v677 = vadd.f32 %v502, %v676
    %v678 = vpop.f32.mrb[0].mxu0
    %679 = vmatprep.mubr.f32.mxu0 0.0
    %680 = vmatmul.mubr.f32.gmra.mrb[0].mxu0 %v541
    %v681 = vpop.f32.mrb[0].mxu0
    %v682 = vadd.f32 %v502, %v681
    %v683 = vpop.f32.mrb[0].mxu0
    %684 = vmatprep.mubr.f32.mxu0 0.0
    %685 = vmatmul.mubr.f32.gmra.mrb[0].mxu0 %v544
    %v686 = vpop.f32.mrb[0].mxu0
    %v687 = vadd.f32 %v502, %v686
    %v688 = vpop.f32.mrb[0].mxu0
    %689 = vmatprep.mubr.f32.mxu0 0.0
    %690 = vmatmul.mubr.f32.gmra.mrb[0].mxu0 %v547
    %v691 = vpop.f32.mrb[0].mxu0
    %v692 = vadd.f32 %v502, %v691
    %v693 = vpop.f32.mrb[0].mxu0
    %694 = vmatprep.mubr.f32.mxu0 0.0
    %695 = vmatmul.mubr.f32.gmra.mrb[0].mxu0 %v550
    %v696 = vpop.f32.mrb[0].mxu0
    %v697 = vadd.f32 %v502, %v696
    %v698 = vpop.f32.mrb[0].mxu0
    %699 = vdwg.mxu0
    %v700 = vmax.f32 %v622, 0.0
    %v701 = vmax.f32 %v627, 0.0
    %v702 = vmax.f32 %v632, 0.0
    %v703 = vmax.f32 %v637, 0.0
    %v704 = vmax.f32 %v642, 0.0
    %v705 = vmax.f32 %v647, 0.0
    %v706 = vmax.f32 %v652, 0.0
    %v707 = vmax.f32 %v657, 0.0
    %v708 = vmax.f32 %v662, 0.0
    %v709 = vmax.f32 %v667, 0.0
    %v710 = vmax.f32 %v672, 0.0
    %v711 = vmax.f32 %v677, 0.0
    %v712 = vmax.f32 %v682, 0.0
    %v713 = vmax.f32 %v687, 0.0
    %v714 = vmax.f32 %v692, 0.0
    %v715 = vmax.f32 %v697, 0.0
    %v716 = vld [vmem:[%s7] sm:$0x3]
    %v717 = vld [vmem:[%s8] sm:$0x3]
    %719 = vset.pattern.permute.xlu0 0
    %720 = vperm.xlu0 %719, %v717
    %v721 = vpop.permute.xlu0 %720
    %vm723 = vcmask 80896
    %v725 = vsel %vm723, %v716, 0
    %v728 = vsel %vm723, %v700, 0
    %v731 = vsel %vm723, %v701, 0
    %v734 = vsel %vm723, %v702, 0
    %v737 = vsel %vm723, %v703, 0
    %v740 = vsel %vm723, %v704, 0
    %v743 = vsel %vm723, %v705, 0
    %v746 = vsel %vm723, %v706, 0
    %v749 = vsel %vm723, %v707, 0
    %v752 = vsel %vm723, %v708, 0
    %v755 = vsel %vm723, %v709, 0
    %v758 = vsel %vm723, %v710, 0
    %v761 = vsel %vm723, %v711, 0
    %v764 = vsel %vm723, %v712, 0
    %v767 = vsel %vm723, %v713, 0
    %v770 = vsel %vm723, %v714, 0
    %v773 = vsel %vm723, %v715, 0
    %775 = vmatprep.subr.mxu0 0.0
    %776 = vmatpush1.xpose.msra.mxu0 %v728
    %777 = vmatprep.subr.mxu0 0.0
    %778 = vmatpush1.xpose.msra.mxu0 %v731
    %779 = vmatprep.subr.mxu0 0.0
    %780 = vmatpush1.xpose.msra.mxu0 %v734
    %781 = vmatprep.subr.mxu0 0.0
    %782 = vmatpush1.xpose.msra.mxu0 %v737
    %783 = vmatprep.subr.mxu0 0.0
    %784 = vmatpush1.xpose.msra.mxu0 %v740
    %785 = vmatprep.subr.mxu0 0.0
    %786 = vmatpush1.xpose.msra.mxu0 %v743
    %787 = vmatprep.subr.mxu0 0.0
    %788 = vmatpush1.xpose.msra.mxu0 %v746
    %789 = vmatprep.subr.mxu0 0.0
    %790 = vmatpush1.xpose.msra.mxu0 %v749
    %791 = vmatprep.subr.mxu0 0.0
    %792 = vmatpush1.xpose.msra.mxu0 %v752
    %793 = vmatprep.subr.mxu0 0.0
    %794 = vmatpush1.xpose.msra.mxu0 %v755
    %795 = vmatprep.subr.mxu0 0.0
    %796 = vmatpush1.xpose.msra.mxu0 %v758
    %797 = vmatprep.subr.mxu0 0.0
    %798 = vmatpush1.xpose.msra.mxu0 %v761
    %799 = vmatprep.subr.mxu0 0.0
    %800 = vmatpush1.xpose.msra.mxu0 %v764
    %801 = vmatprep.subr.mxu0 0.0
    %802 = vmatpush1.xpose.msra.mxu0 %v767
    %803 = vmatprep.subr.mxu0 0.0
    %804 = vmatpush1.xpose.msra.mxu0 %v770
    %805 = vmatprep.subr.mxu0 0.0
    %806 = vmatpush1.xpose.msra.mxu0 %v773
    %807 = vmatprep.subr.mxu0 0.0
    %808 = vmatpush1.xpose.msra.mxu0 0.0
    %809 = vmatprep.subr.mxu0 0.0
    %810 = vmatpush1.xpose.msra.mxu0 0.0
    %811 = vmatprep.subr.mxu0 0.0
    %812 = vmatpush1.xpose.msra.mxu0 0.0
    %813 = vmatprep.subr.mxu0 0.0
    %814 = vmatpush1.xpose.msra.mxu0 0.0
    %815 = vmatprep.subr.mxu0 0.0
    %816 = vmatpush1.xpose.msra.mxu0 0.0
    %817 = vmatprep.subr.mxu0 0.0
    %818 = vmatpush1.xpose.msra.mxu0 0.0
    %819 = vmatprep.subr.mxu0 0.0
    %820 = vmatpush1.xpose.msra.mxu0 0.0
    %821 = vmatprep.subr.mxu0 0.0
    %822 = vmatpush1.xpose.msra.mxu0 0.0
    %823 = vmatprep.subr.mxu0 0.0
    %824 = vmatpush1.xpose.msra.mxu0 0.0
    %825 = vmatprep.subr.mxu0 0.0
    %826 = vmatpush1.xpose.msra.mxu0 0.0
    %827 = vmatprep.subr.mxu0 0.0
    %828 = vmatpush1.xpose.msra.mxu0 0.0
    %829 = vmatprep.subr.mxu0 0.0
    %830 = vmatpush1.xpose.msra.mxu0 0.0
    %831 = vmatprep.subr.mxu0 0.0
    %832 = vmatpush1.xpose.msra.mxu0 0.0
    %833 = vmatprep.subr.mxu0 0.0
    %834 = vmatpush1.xpose.msra.mxu0 0.0
    %835 = vmatprep.subr.mxu0 0.0
    %836 = vmatpush1.xpose.msra.mxu0 0.0
    %837 = vmatprep.subr.mxu0 0.0
    %838 = vmatpush1.xpose.msra.mxu0 0.0
    %839 = vmatprep.mubr.f32.mxu0 0.0
    %840 = vmatmul.mubr.f32.gmra.mrb[0].mxu0 %v725
    %v841 = vpop.f32.mrb[0].mxu0
    %v842 = vadd.f32 %v721, %v841
    %v843 = vpop.f32.mrb[0].mxu0
    %844 = vdwg.mxu0
    %845 = vst [vmem:[#allocation2] sm:$0x3] %v842
    // Predicated region
    $region38: #{tpu_custom_call.1} parent=1 // pred_check
      _
    $region39: #{tpu_custom_call.1} parent=1 // pred_check_branch
      %847 = sbr.rel (0) target = $region41
    $region40: #{tpu_custom_call.1} parent=1 // pred_region
      %s849 = ssub.s32 32, 32
      %850 = vsyncadd [#allocation3], %s849
      %s852 = sshll.u32 [#allocation2], 4
      %s853 = int_to_ptr.vmem [resolvable:$true] %s852
      %855 = dma.vmem_to_hbm [thread:$0]  %s853, 32, %s9, [#allocation3]
    $region41: #{tpu_custom_call.1} parent=1 // pred_fallthru
      _
    // Predicated region
    $region42: #{tpu_custom_call.1} parent=1 // pred_check
      _
    $region43: #{tpu_custom_call.1} parent=1 // pred_check_branch
      %857 = sbr.rel (0) target = $region45
    $region44: #{tpu_custom_call.1} parent=1 // pred_region
      %858 = dma.done [#allocation3], 32
    $region45: #{tpu_custom_call.1} parent=1 // pred_fallthru
      _
    %859 = vsyncpa [#allocation3], 1

</llo_original>
